<compile_context>
chip_gen: v7x
topology: tpu7x:2x2x1
jax: 0.10.0
libtpu: 0.0.40
codegen_flags: <defaults>
</compile_context>

<pallas_src>
import functools

import jax
import jax.numpy as jnp
from jax.experimental import pallas as pl
from jax.experimental.pallas import tpu as pltpu


_TARGET_BLOCK_BYTES = 2 * 1024 * 1024   # ~2 MiB per input block (fits every gen)


def _sublane_multiple(dtype):
    return {4: 8, 2: 16, 1: 32}.get(jnp.dtype(dtype).itemsize, 8)


def _weighted_bce(x, t, seq_len):
    # Numerically stable BCE-with-logits (same formula torch uses):
    #   max(x, 0) - x*t + log(1 + exp(-|x|))
    bce = jnp.maximum(x, 0.0) - x * t + jnp.log1p(jnp.exp(-jnp.abs(x)))
    # weights = target, except exact zeros are replaced by 1.1 / seq_len
    w = jnp.where(t == 0.0, jnp.float32(1.1 / seq_len), t)
    return w * bce


def _mean_kernel(x_ref, t_ref, o_ref, *, seq_len, rows, tile_rows):
    x = x_ref[...].astype(jnp.float32)
    t = t_ref[...].astype(jnp.float32)
    wbce = _weighted_bce(x, t, seq_len)
    if rows % tile_rows != 0:
        # Ragged row tail: the trailing block holds garbage rows -> mask them.
        row0 = pl.program_id(0) * tile_rows
        rid = jax.lax.broadcasted_iota(jnp.int32, wbce.shape, 0)
        wbce = jnp.where(row0 + rid < rows, wbce, 0.0)
    # Per-tile partial sum (XLU reduce, hides under the 2 MiB DMA).
    o_ref[0, 0] = jnp.sum(wbce)


def _none_kernel(x_ref, t_ref, o_ref, *, seq_len):
    x = x_ref[...].astype(jnp.float32)
    t = t_ref[...].astype(jnp.float32)
    # Ragged edge blocks: garbage rows are computed but the output writeback
    # is clipped to the array bounds, so no masking is needed here.
    o_ref[...] = _weighted_bce(x, t, seq_len).astype(o_ref.dtype)


def bce_weighted(output, target, reduction="mean"):
    """Pallas implementation of BCEWeighted.forward(output, target)."""
    assert reduction in ("none", "mean")
    assert output.shape == target.shape
    assert output.ndim >= 2, "module reads seq_len from axis 1"
    seq_len = output.shape[1]
    orig_shape = output.shape
    out_dtype = jnp.promote_types(output.dtype, target.dtype)
    n = output.size

    # Zero-copy lane-dense 2-D view (contiguous reshape only, never a pad/copy).
    if n % 512 == 0:
        cols = 512
    elif n % 128 == 0:
        cols = 128
    else:
        cols = orig_shape[-1]          # block last dim == full dim -> legal
    rows = n // cols
    x2 = output.reshape(rows, cols)
    t2 = target.reshape(rows, cols)

    itemsize = max(jnp.dtype(output.dtype).itemsize,
                   jnp.dtype(target.dtype).itemsize)
    sub = max(_sublane_multiple(output.dtype), _sublane_multiple(target.dtype))
    tile_rows = max(sub, (_TARGET_BLOCK_BYTES // (cols * itemsize)) // sub * sub)
    if tile_rows >= rows:
        tile_rows = rows               # single row-block == full dim -> legal
    grid_r = pl.cdiv(rows, tile_rows)
    # TODO(synk): for pathologically wide trailing dims (cols*itemsize > a few
    # MiB with rows tiny) the lane dimension should also be tiled.

    in_spec = pl.BlockSpec((tile_rows, cols), lambda i: (i, 0))
    in_bytes = n * (jnp.dtype(output.dtype).itemsize
                    + jnp.dtype(target.dtype).itemsize)
    compiler_params = pltpu.CompilerParams(
        dimension_semantics=("parallel",),
        vmem_limit_bytes=32 * 1024 * 1024,
    )

    if reduction == "mean":
        partials = pl.pallas_call(
            functools.partial(_mean_kernel, seq_len=seq_len,
                              rows=rows, tile_rows=tile_rows),
            out_shape=jax.ShapeDtypeStruct((1, grid_r), jnp.float32),
            grid_spec=pltpu.PrefetchScalarGridSpec(
                num_scalar_prefetch=0,
                grid=(grid_r,),
                in_specs=[in_spec, in_spec],
                out_specs=pl.BlockSpec(
                    (1, 1), lambda i: (0, i),
                    memory_space=pltpu.MemorySpace.SMEM),
            ),
            compiler_params=compiler_params,
            cost_estimate=pl.CostEstimate(
                flops=8 * n, transcendentals=2 * n,
                bytes_accessed=in_bytes + 4 * grid_r),
        )(x2, t2)
        # Final tree reduce + 1/N scale in the wrapper (tiny, grid_r values).
        return (jnp.sum(partials) * jnp.float32(1.0 / n)).astype(out_dtype)

    # reduction == 'none'
    out_bytes = n * jnp.dtype(out_dtype).itemsize
    loss2 = pl.pallas_call(
        functools.partial(_none_kernel, seq_len=seq_len),
        out_shape=jax.ShapeDtypeStruct((rows, cols), out_dtype),
        grid_spec=pltpu.PrefetchScalarGridSpec(
            num_scalar_prefetch=0,
            grid=(grid_r,),
            in_specs=[in_spec, in_spec],
            out_specs=pl.BlockSpec((tile_rows, cols), lambda i: (i, 0)),
        ),
        compiler_params=compiler_params,
        cost_estimate=pl.CostEstimate(
            flops=8 * n, transcendentals=2 * n,
            bytes_accessed=in_bytes + out_bytes),
    )(x2, t2)
    return loss2.reshape(orig_shape)


def _reference(output, target, reduction="mean"):
    # pure-JAX reference mirroring the PyTorch module (compute in f32)
    seq_len = output.shape[1]
    x = output.astype(jnp.float32)
    t = target.astype(jnp.float32)
    bce = jnp.maximum(x, 0.0) - x * t + jnp.log1p(jnp.exp(-jnp.abs(x)))
    w = jnp.where(t == 0.0, 1.1 / seq_len, t)
    loss = w * bce
    out_dtype = jnp.promote_types(output.dtype, target.dtype)
    if reduction == "mean":
        return jnp.mean(loss).astype(out_dtype)
    return loss.astype(out_dtype)


if __name__ == "__main__":
    key = jax.random.PRNGKey(0)
    k1, k2, k3, k4 = jax.random.split(key, 4)

    # shape 1: lane-aligned case (batch, seq_len on axis 1, feature)
    B, S, D = 2, 8, 128
    logits = jax.random.normal(k1, (B, S, D), dtype=jnp.float32)
    target = jax.random.bernoulli(k2, p=0.3, shape=(B, S, D)).astype(jnp.float32)

    loss_mean = bce_weighted(logits, target, reduction="mean")
    jax.block_until_ready(loss_mean)
    assert jnp.allclose(loss_mean, _reference(logits, target, "mean"),
                        rtol=1e-5, atol=1e-5)

    loss_none = bce_weighted(logits, target, reduction="none")
    jax.block_until_ready(loss_none)
    ref_none = _reference(logits, target, "none")
    assert loss_none.shape == ref_none.shape
    assert jnp.allclose(loss_none, ref_none, rtol=1e-5, atol=1e-5)

    # shape 2: ragged case that exercises the no-pad / masked-tail path
    B2, S2, D2 = 2, 7, 96
    logits2 = jax.random.normal(k3, (B2, S2, D2), dtype=jnp.float32)
    target2 = jax.random.bernoulli(k4, p=0.3, shape=(B2, S2, D2)).astype(jnp.float32)

    loss_mean2 = bce_weighted(logits2, target2, reduction="mean")
    jax.block_until_ready(loss_mean2)
    assert jnp.allclose(loss_mean2, _reference(logits2, target2, "mean"),
                        rtol=1e-5, atol=1e-5)

    loss_none2 = bce_weighted(logits2, target2, reduction="none")
    jax.block_until_ready(loss_none2)
    assert jnp.allclose(loss_none2, _reference(logits2, target2, "none"),
                        rtol=1e-5, atol=1e-5)

    # shape 3: bf16 inputs (exercises sublane-packing-aware tile choice)
    logits3 = jax.random.normal(k3, (B, S, D), dtype=jnp.bfloat16)
    target3 = jax.random.bernoulli(k4, p=0.3, shape=(B, S, D)).astype(jnp.bfloat16)

    loss_mean3 = bce_weighted(logits3, target3, reduction="mean")
    jax.block_until_ready(loss_mean3)
    assert jnp.allclose(loss_mean3.astype(jnp.float32),
                        _reference(logits3, target3, "mean").astype(jnp.float32),
                        rtol=2e-2, atol=2e-2)

    loss_none3 = bce_weighted(logits3, target3, reduction="none")
    jax.block_until_ready(loss_none3)
    assert jnp.allclose(loss_none3.astype(jnp.float32),
                        _reference(logits3, target3, "none").astype(jnp.float32),
                        rtol=2e-2, atol=2e-2)

    print("KERNEL_OK")
</pallas_src>

<mosaic_0001>
module attributes {stable_mosaic.version = 11 : i64} {
  func.func @_mean_kernel(%arg0: i32, %arg1: memref<4x512xf32, #tpu.memory_space<vmem>>, %arg2: memref<4x512xf32, #tpu.memory_space<vmem>>, %arg3: memref<1x1xf32, #tpu.memory_space<smem>>) attributes {dimension_semantics = [#tpu.dimension_semantics<parallel>], iteration_bounds = array<i64: 1>, scalar_prefetch = 0 : i64, scratch_operands = 0 : i64, tpu.core_type = #tpu.core_type<tc>, window_params = [{transform_indices = @transform_0, window_bounds = array<i64: 4, 512>}, {transform_indices = @transform_1, window_bounds = array<i64: 4, 512>}, {transform_indices = @transform_2, window_bounds = array<i64: 1, 1>}]} {
    %c0 = arith.constant 0 : index
    %c0_0 = arith.constant 0 : index
    %0 = vector.load %arg1[%c0, %c0_0] : memref<4x512xf32, #tpu.memory_space<vmem>>, vector<4x512xf32>
    %c0_1 = arith.constant 0 : index
    %c0_2 = arith.constant 0 : index
    %1 = vector.load %arg2[%c0_1, %c0_2] : memref<4x512xf32, #tpu.memory_space<vmem>>, vector<4x512xf32>
    %cst = arith.constant 0.000000e+00 : f32
    %2 = vector.broadcast %cst : f32 to vector<4x512xf32>
    %3 = arith.maximumf %0, %2 : vector<4x512xf32>
    %4 = arith.mulf %0, %1 : vector<4x512xf32>
    %5 = arith.subf %3, %4 : vector<4x512xf32>
    %6 = math.absf %0 : vector<4x512xf32>
    %cst_3 = arith.constant 0.000000e+00 : f32
    %7 = vector.broadcast %cst_3 : f32 to vector<4x512xf32>
    %8 = arith.subf %7, %6 : vector<4x512xf32>
    %9 = math.exp %8 : vector<4x512xf32>
    %10 = math.log1p %9 : vector<4x512xf32>
    %11 = arith.addf %5, %10 : vector<4x512xf32>
    %cst_4 = arith.constant 0.000000e+00 : f32
    %12 = vector.broadcast %cst_4 : f32 to vector<4x512xf32>
    %13 = arith.cmpf oeq, %1, %12 : vector<4x512xf32>
    %cst_5 = arith.constant 1.375000e-01 : f32
    %14 = vector.broadcast %cst_5 : f32 to vector<4x512xf32>
    %15 = arith.select %13, %14, %1 : vector<4x512xi1>, vector<4x512xf32>
    %16 = arith.mulf %15, %11 : vector<4x512xf32>
    %17 = vector.shape_cast %16 : vector<4x512xf32> to vector<1x4x512xf32>
    %cst_6 = arith.constant dense<0.000000e+00> : vector<1xf32>
    %18 = vector.multi_reduction <add>, %17, %cst_6 [1, 2] : vector<1x4x512xf32> to vector<1xf32>
    %19 = vector.shape_cast %18 : vector<1xf32> to vector<1x1x1xf32>
    %20 = vector.extract %19[0, 0, 0] : f32 from vector<1x1x1xf32>
    %c0_7 = arith.constant 0 : index
    %c0_8 = arith.constant 0 : index
    %21 = memref.load %arg3[%c0_7, %c0_8] : memref<1x1xf32, #tpu.memory_space<smem>>
    memref.store %20, %arg3[%c0_7, %c0_8] : memref<1x1xf32, #tpu.memory_space<smem>>
    return
  }
  func.func @transform_0(%arg0: i32) -> (i32, i32) {
    %c0_i32 = arith.constant 0 : i32
    %c0_i32_0 = arith.constant 0 : i32
    return %arg0, %c0_i32 : i32, i32
  }
  func.func @transform_1(%arg0: i32) -> (i32, i32) {
    %c0_i32 = arith.constant 0 : i32
    %c0_i32_0 = arith.constant 0 : i32
    return %arg0, %c0_i32 : i32, i32
  }
  func.func @transform_2(%arg0: i32) -> (i32, i32) {
    %c0_i32 = arith.constant 0 : i32
    %c0_i32_0 = arith.constant 0 : i32
    return %c0_i32, %arg0 : i32, i32
  }
}

</mosaic_0001>

<llo_original>
// kernel: tpu_custom_call.1
$region0: #{tpu_custom_call.1}
  #allocation0 [shape = 'u32[]', space=smem, size = 0x4, offset = 0x4, fixed_abs, tag = 'smem constant byte address 0x4 - core index']
  #allocation1 [shape = 'u32[144,128]{1,0:T(1,128)}', space=vmem, size = 0x12000, scoped, tag = 'internal scratch']
  %s0 = inlined_call_operand.hbm [shape: f32[4,512], index: 0, kind: input, shape index: {}]
  %s1 = inlined_call_operand.hbm [shape: f32[4,512], index: 1, kind: input, shape index: {}]
  %s2 = inlined_call_operand.hbm [shape: f32[1,1], index: 2, kind: output, shape index: {}]
  %s3 = sld [smem:[#allocation0]]
  $region26: #{tpu_custom_call.1} parent=0
    _
  %s5 = ssub.s32 1, %s3
  %s6 = scalar_select 0, %s5, %s3
  $region1: #{tpu_custom_call.1} parent=0
    #allocation2 [shape = 'u8[8192]{0}', space=vmem, size = 0x2000, scoped, tag = 'input window, operand 0, single buffered']
    #allocation3 [shape = 's32[1]{0}', space=sflag, size = 0x4, scoped, tag = 'scoped memory for tpu_custom_call.1']
    #allocation4 [shape = 's32[1]{0}', space=sflag, size = 0x4, scoped, tag = 'scoped memory for tpu_custom_call.1']
    #allocation5 [shape = 'u8[8192]{0}', space=vmem, size = 0x2000, scoped, tag = 'input window, operand 1, single buffered']
    #allocation6 [shape = 's32[1]{0}', space=sflag, size = 0x4, scoped, tag = 'scoped memory for tpu_custom_call.1']
    #allocation7 [shape = 'u8[512]{0}', space=smem, size = 0x200, scoped, tag = 'output window, operand 0, single buffered']
    %7 = vsyncpa [#allocation3], 0
    %8 = vsyncpa [#allocation6], 0
    %9 = vsyncpa [#allocation4], 0
    // Predicated region
    $region2: #{tpu_custom_call.1} parent=1 // pred_check
      _
    $region3: #{tpu_custom_call.1} parent=1 // pred_check_branch
      %11 = sbr.rel (0) target = $region5
    $region4: #{tpu_custom_call.1} parent=1 // pred_region
      %s13 = ssub.s32 256, 256
      %14 = vsyncadd [#allocation3], %s13
      %s16 = sshll.u32 [#allocation2], 4
      %s17 = int_to_ptr.vmem [resolvable:$true] %s16
      %19 = dma.hbm_to_vmem [thread:$0]  %s0, 256, %s17, [#allocation3]
    $region5: #{tpu_custom_call.1} parent=1 // pred_fallthru
      _
    // Predicated region
    $region6: #{tpu_custom_call.1} parent=1 // pred_check
      _
    $region7: #{tpu_custom_call.1} parent=1 // pred_check_branch
      %21 = sbr.rel (0) target = $region9
    $region8: #{tpu_custom_call.1} parent=1 // pred_region
      %s23 = ssub.s32 256, 256
      %24 = vsyncadd [#allocation6], %s23
      %s26 = sshll.u32 [#allocation5], 4
      %s27 = int_to_ptr.vmem [resolvable:$true] %s26
      %29 = dma.hbm_to_vmem [thread:$0]  %s1, 256, %s27, [#allocation6]
    $region9: #{tpu_custom_call.1} parent=1 // pred_fallthru
      _
    // Predicated region
    $region10: #{tpu_custom_call.1} parent=1 // pred_check
      _
    $region11: #{tpu_custom_call.1} parent=1 // pred_check_branch
      %31 = sbr.rel (0) target = $region13
    $region12: #{tpu_custom_call.1} parent=1 // pred_region
      %32 = dma.done [#allocation3], 256
    $region13: #{tpu_custom_call.1} parent=1 // pred_fallthru
      _
    // Predicated region
    $region14: #{tpu_custom_call.1} parent=1 // pred_check
      _
    $region15: #{tpu_custom_call.1} parent=1 // pred_check_branch
      %34 = sbr.rel (0) target = $region17
    $region16: #{tpu_custom_call.1} parent=1 // pred_region
      %35 = dma.done [#allocation6], 256
    $region17: #{tpu_custom_call.1} parent=1 // pred_fallthru
      _
    %v36 = vld [vmem:[#allocation2] sm:$0xff]
    %v37 = vld [vmem:[#allocation2 + $0x8] sm:$0xff]
    %v38 = vld [vmem:[#allocation5] sm:$0xff]
    %v39 = vld [vmem:[#allocation5 + $0x8] sm:$0xff]
    %v40 = vmax.f32 %v36, 0.0
    %v41 = vmax.f32 %v37, 0.0
    %v42 = vmul.f32 %v36, %v38
    %v43 = vmul.f32 %v37, %v39
    %v44 = vsub.f32 %v40, %v42
    %v45 = vsub.f32 %v41, %v43
    %v46 = vand.u32 2147483647, %v36
    %v47 = vand.u32 2147483647, %v37
    %v48 = vsub.f32 0.0, %v46
    %v49 = vsub.f32 0.0, %v47
    %v50 = vmul.f32 %v48, 1.442695
    %v51 = vpow.pop %v50
    %v52 = vmul.f32 %v49, 1.442695
    %v53 = vpow.pop %v52
    %v54 = vadd.f32 %v51, 1.0
    %v55 = vlog2.pop %v54
    %v56 = vmul.f32 %v55, 0.6931472
    %v57 = vmul.f32 -0.5, %v51
    %v58 = vadd.f32 %v57, 1.0
    %v59 = vmul.f32 %v58, %v51
    %v60 = vand.u32 2147483647, %v51
    %vm61 = vcmp.lt.f32.partialorder %v60, 0.0004427343
    %v62 = vsel %vm61, %v59, %v56
    %v63 = vadd.f32 %v53, 1.0
    %v64 = vlog2.pop %v63
    %v65 = vmul.f32 %v64, 0.6931472
    %v66 = vmul.f32 -0.5, %v53
    %v67 = vadd.f32 %v66, 1.0
    %v68 = vmul.f32 %v67, %v53
    %v69 = vand.u32 2147483647, %v53
    %vm70 = vcmp.lt.f32.partialorder %v69, 0.0004427343
    %v71 = vsel %vm70, %v68, %v65
    %v72 = vadd.f32 %v44, %v62
    %v73 = vadd.f32 %v45, %v71
    %vm74 = vcmp.eq.f32.partialorder %v38, 0.0
    %vm75 = vcmp.eq.f32.partialorder %v39, 0.0
    %v76 = vsel %vm74, 0.1375, %v38
    %v77 = vsel %vm75, 0.1375, %v39
    %v78 = vmul.f32 %v76, %v72
    %v79 = vmul.f32 %v77, %v73
    %v82 = vcombine.high %v78, %v78
    %v83 = vcombine.high %v79, %v79
    %vm86 = vcmask 1043456
    %v87 = vsel %vm86, %v78, 0.0
    %v88 = vsel %vm86, %v82, 0.0
    %v89 = vadd.f32 %v87, %v88
    %v90 = vsel %vm86, %v79, 0.0
    %v91 = vadd.f32 %v89, %v90
    %v92 = vsel %vm86, %v83, 0.0
    %v93 = vadd.f32 %v91, %v92
    %94 = vadd.xlane.f32.xlu0 %v93
    %v95 = vpop.xlane.xlu0 %94
    %v96 = vrot.slane %v95, 4
    %v97 = vadd.f32 %v95, %v96
    %v98 = vrot.slane %v97, 2
    %v99 = vadd.f32 %v97, %v98
    %v100 = vrot.slane %v99, 1
    %v101 = vadd.f32 %v99, %v100
    %s102 = vtos %v101
    %s103 = scalar_lea.smem [#allocation7], 0
    %104 = sst [smem:[%s103]] %s102
    // Predicated region
    $region18: #{tpu_custom_call.1} parent=1 // pred_check
      _
    $region19: #{tpu_custom_call.1} parent=1 // pred_check_branch
      %106 = sbr.rel (0) target = $region21
    $region20: #{tpu_custom_call.1} parent=1 // pred_region
      %s108 = ssub.s32 16, 16
      %109 = vsyncadd [#allocation4], %s108
      %112 = dma.smem_to_hbm [#allocation7], 16, %s2, [#allocation4]
    $region21: #{tpu_custom_call.1} parent=1 // pred_fallthru
      _
    // Predicated region
    $region22: #{tpu_custom_call.1} parent=1 // pred_check
      _
    $region23: #{tpu_custom_call.1} parent=1 // pred_check_branch
      %114 = sbr.rel (0) target = $region25
    $region24: #{tpu_custom_call.1} parent=1 // pred_region
      %115 = dma.done [#allocation4], 16
    $region25: #{tpu_custom_call.1} parent=1 // pred_fallthru
      _
    %116 = sfence
    %117 = vsyncpa [#allocation3], 1
    %118 = vsyncpa [#allocation6], 1
    %119 = vsyncpa [#allocation4], 1

</llo_original>
